<compile_context>
chip_gen: v6e
topology: v6e:2x2x1
jax: 0.10.0
libtpu: 0.0.40
codegen_flags: <defaults>
</compile_context>

<pallas_src>
import jax
import jax.numpy as jnp
from jax import lax
from jax.experimental import pallas as pl
from jax.experimental.pallas import tpu as pltpu


# ----------------------------------------------------------------------------
# Fused kernel (one grid step = one graph), transposed dataflow [*, N]
# ----------------------------------------------------------------------------
def _fused_pressure_gnn_kernel(at_ref, xt_ref, w1t_ref, b1_ref,
                               w2t_ref, b2_ref, w3_ref, o_ref):
    at = at_ref[0]                                    # [N, N] bf16, = A_norm^T
    xt = xt_ref[0]                                    # [F_in, N] bf16, = X^T

    # ---- GCNConv(F_in -> H) + ReLU, reassociated: h1^T = W1^T (X^T A^T) ----
    m = jnp.dot(xt, at, preferred_element_type=jnp.float32)          # [F_in, N]
    h1 = jnp.dot(w1t_ref[...], m.astype(jnp.bfloat16),
                 preferred_element_type=jnp.float32)                 # [H, N]
    h1 = jnp.maximum(h1 + b1_ref[...], 0.0)          # f32 elementwise (v5e-safe)

    # ---- GCNConv(H -> H) + ReLU: h2^T = W2^T (h1^T A^T) --------------------
    t = jnp.dot(h1.astype(jnp.bfloat16), at,
                preferred_element_type=jnp.float32)                  # [H, N]
    h2 = jnp.dot(w2t_ref[...], t.astype(jnp.bfloat16),
                 preferred_element_type=jnp.float32)                 # [H, N]
    h2 = jnp.maximum(h2 + b2_ref[...], 0.0)

    # ---- Linear(H -> 1) head, y^T = W3 h2^T  (N on the lane axis) ----------
    out = jnp.dot(w3_ref[...], h2.astype(jnp.bfloat16),
                  preferred_element_type=jnp.float32)                # [1, N]
    o_ref[0] = out.astype(o_ref.dtype)


# ----------------------------------------------------------------------------
# Forward wrapper (params already bf16/transposed; A^T already bf16)
# ----------------------------------------------------------------------------
def pressure_gnn_forward(dev_params, x, at_bf16):
    """x: [B, N, F_in] f32, at_bf16: [B, N, N] bf16 (= A_norm^T). Returns [B, N, 1]."""
    b, n, f_in = x.shape
    h = dev_params["w1t"].shape[0]

    # Per-call layout plumbing only (x changes every call; weights/A are hoisted).
    xt = jnp.swapaxes(x, 1, 2).astype(jnp.bfloat16)                  # [B, F_in, N]

    flops = b * (2 * f_in * n * n        # X^T @ A^T
                 + 2 * h * f_in * n      # W1^T @ m
                 + 2 * h * n * n         # h1^T @ A^T
                 + 2 * h * h * n         # W2^T @ t
                 + 2 * h * n)            # head
    bytes_accessed = (2 * b * (n * n + f_in * n)                     # bf16 A^T, X^T
                      + 2 * (h * f_in + h * h + h)                   # bf16 weights
                      + 4 * 2 * h + 4 * b * n)                       # f32 biases, out

    out_b1n = pl.pallas_call(
        _fused_pressure_gnn_kernel,
        out_shape=jax.ShapeDtypeStruct((b, 1, n), jnp.float32),
        grid=(b,),
        in_specs=[
            pl.BlockSpec((1, n, n), lambda i: (i, 0, 0)),     # A^T  (per-graph)
            pl.BlockSpec((1, f_in, n), lambda i: (i, 0, 0)),  # X^T  (per-graph)
            pl.BlockSpec((h, f_in), lambda i: (0, 0)),        # W1^T (resident)
            pl.BlockSpec((h, 1), lambda i: (0, 0)),           # b1   (resident)
            pl.BlockSpec((h, h), lambda i: (0, 0)),           # W2^T (resident)
            pl.BlockSpec((h, 1), lambda i: (0, 0)),           # b2   (resident)
            pl.BlockSpec((1, h), lambda i: (0, 0)),           # W3   (resident)
        ],
        out_specs=pl.BlockSpec((1, 1, n), lambda i: (i, 0, 0)),
        compiler_params=pltpu.CompilerParams(
            dimension_semantics=("parallel",)),
        cost_estimate=pl.CostEstimate(flops=flops, transcendentals=0,
                                      bytes_accessed=bytes_accessed),
    )(at_bf16, xt, dev_params["w1t"], dev_params["b1"],
      dev_params["w2t"], dev_params["b2"], dev_params["w3"])

    # [B, 1, N] (N on lanes inside kernel) -> [B, N, 1]; scalar b3 folded here.
    return jnp.swapaxes(out_b1n, 1, 2) + dev_params["b3"]


# ----------------------------------------------------------------------------
# Setup-time glue (runs ONCE per graph / per parameter set, not per forward)
# ----------------------------------------------------------------------------
def gcn_normalized_adjacency(edge_index, num_nodes):
    """Dense D^{-1/2} (A + I) D^{-1/2} from a [2, E] edge_index (plain JAX)."""
    src, dst = edge_index[0], edge_index[1]
    a = jnp.zeros((num_nodes, num_nodes), jnp.float32)
    a = a.at[dst, src].add(1.0)                       # scatter-ADD, like PyG
    a = a + jnp.eye(num_nodes, dtype=jnp.float32)     # self loops
    deg = jnp.sum(a, axis=1)
    d_inv_sqrt = lax.rsqrt(jnp.maximum(deg, 1e-12))
    return a * d_inv_sqrt[:, None] * d_inv_sqrt[None, :]


def init_params(key, in_feats, hidden, out_feats):
    """Reference (torch-layout, f32) parameters."""
    ks = jax.random.split(key, 6)
    scale = lambda fan_in: 1.0 / jnp.sqrt(jnp.float32(fan_in))
    return {
        "gcn1_w": jax.random.normal(ks[0], (in_feats, hidden), jnp.float32) * scale(in_feats),
        "gcn1_b": jax.random.normal(ks[1], (hidden,), jnp.float32) * 0.01,
        "gcn2_w": jax.random.normal(ks[2], (hidden, hidden), jnp.float32) * scale(hidden),
        "gcn2_b": jax.random.normal(ks[3], (hidden,), jnp.float32) * 0.01,
        "lin_w": jax.random.normal(ks[4], (out_feats, hidden), jnp.float32) * scale(hidden),
        "lin_b": jax.random.normal(ks[5], (out_feats,), jnp.float32) * 0.01,
    }


def make_device_params(p):
    """One-time cast/transpose to the kernel's layout (hoisted out of forward)."""
    hidden = p["gcn1_w"].shape[1]
    return {
        "w1t": jnp.asarray(p["gcn1_w"].T, jnp.bfloat16),          # [H, F_in]
        "b1": p["gcn1_b"].reshape(hidden, 1).astype(jnp.float32),  # [H, 1]
        "w2t": jnp.asarray(p["gcn2_w"].T, jnp.bfloat16),           # [H, H]
        "b2": p["gcn2_b"].reshape(hidden, 1).astype(jnp.float32),  # [H, 1]
        "w3": jnp.asarray(p["lin_w"], jnp.bfloat16),               # [1, H]
        "b3": p["lin_b"].astype(jnp.float32),                      # [1]
    }


def _reference_forward(params, x_b, a_b):
    """Pure-JAX f32 reference (original [N, H] orientation), batched via vmap."""
    def one(x, a):
        h = jnp.maximum(a @ (x @ params["gcn1_w"]) + params["gcn1_b"], 0.0)
        h = jnp.maximum(a @ (h @ params["gcn2_w"]) + params["gcn2_b"], 0.0)
        return h @ params["lin_w"].T + params["lin_b"]
    return jax.vmap(one)(x_b, a_b)


# TODO(synk): BatchNorm1d / Dropout branches of add_layer are not exercised in
# this config (batch_norm=False, dropout=0.0 -> identity in eval mode).

if __name__ == "__main__":
    B, N_NODES, IN_FEATS, HIDDEN, OUT_FEATS = 8, 16, 8, 32, 1

    key = jax.random.PRNGKey(0)
    k_x, k_e, k_p = jax.random.split(key, 3)

    # Batched node features: [B, N, F_in]
    x = jax.random.normal(k_x, (B, N_NODES, IN_FEATS), jnp.float32)

    # Per-graph deterministic edge_index: bidirectional ring + a few random edges.
    edge_keys = jax.random.split(k_e, B)
    a_list = []
    for bi in range(B):
        ring_src = jnp.arange(N_NODES, dtype=jnp.int32)
        ring_dst = (ring_src + 1) % N_NODES
        rand_src = jax.random.randint(edge_keys[bi], (8,), 0, N_NODES, dtype=jnp.int32)
        rand_dst = (rand_src + 3) % N_NODES
        edge_index = jnp.stack(
            [jnp.concatenate([ring_src, ring_dst, rand_src]),
             jnp.concatenate([ring_dst, ring_src, rand_dst])], axis=0)
        a_list.append(gcn_normalized_adjacency(edge_index, N_NODES))
    a_norm_b = jnp.stack(a_list)                                   # [B, N, N] f32

    # Hoisted one-time conversions: A^T in bf16, weights bf16/transposed.
    at_bf16 = jax.block_until_ready(
        jnp.swapaxes(a_norm_b, 1, 2).astype(jnp.bfloat16))         # [B, N, N] bf16
    params = init_params(k_p, IN_FEATS, HIDDEN, OUT_FEATS)
    dev_params = jax.tree_util.tree_map(jax.block_until_ready,
                                        make_device_params(params))

    fwd = jax.jit(pressure_gnn_forward)
    out = jax.block_until_ready(fwd(dev_params, x, at_bf16))

    assert out.shape == (B, N_NODES, OUT_FEATS), out.shape
    assert out.dtype == jnp.float32
    assert bool(jnp.all(jnp.isfinite(out)))

    # Check vs. f32 reference (kernel uses bf16 MXU operands, f32 accumulation).
    ref = _reference_forward(params, x, a_norm_b)
    assert bool(jnp.allclose(out, ref, atol=5e-2, rtol=5e-2))

    print("KERNEL_OK")
</pallas_src>

<mosaic_0001>
module attributes {stable_mosaic.version = 11 : i64} {
  func.func @_fused_pressure_gnn_kernel(%arg0: i32, %arg1: memref<1x16x16xbf16, #tpu.memory_space<vmem>>, %arg2: memref<1x8x16xbf16, #tpu.memory_space<vmem>>, %arg3: memref<32x8xbf16, #tpu.memory_space<vmem>>, %arg4: memref<32x1xf32, #tpu.memory_space<vmem>>, %arg5: memref<32x32xbf16, #tpu.memory_space<vmem>>, %arg6: memref<32x1xf32, #tpu.memory_space<vmem>>, %arg7: memref<1x32xbf16, #tpu.memory_space<vmem>>, %arg8: memref<1x1x16xf32, #tpu.memory_space<vmem>>) attributes {dimension_semantics = [#tpu.dimension_semantics<parallel>], iteration_bounds = array<i64: 8>, scalar_prefetch = 0 : i64, scratch_operands = 0 : i64, tpu.core_type = #tpu.core_type<tc>, window_params = [{transform_indices = @transform_0, window_bounds = array<i64: 1, 16, 16>}, {transform_indices = @transform_1, window_bounds = array<i64: 1, 8, 16>}, {pipeline_mode = #tpu.pipeline_mode<synchronous>, transform_indices = @transform_2, window_bounds = array<i64: 32, 8>}, {pipeline_mode = #tpu.pipeline_mode<synchronous>, transform_indices = @transform_3, window_bounds = array<i64: 32, 1>}, {pipeline_mode = #tpu.pipeline_mode<synchronous>, transform_indices = @transform_4, window_bounds = array<i64: 32, 32>}, {pipeline_mode = #tpu.pipeline_mode<synchronous>, transform_indices = @transform_5, window_bounds = array<i64: 32, 1>}, {pipeline_mode = #tpu.pipeline_mode<synchronous>, transform_indices = @transform_6, window_bounds = array<i64: 1, 32>}, {transform_indices = @transform_7, window_bounds = array<i64: 1, 1, 16>}]} {
    %c0 = arith.constant 0 : index
    %c0_0 = arith.constant 0 : index
    %c0_1 = arith.constant 0 : index
    %0 = vector.load %arg1[%c0, %c0_0, %c0_1] : memref<1x16x16xbf16, #tpu.memory_space<vmem>>, vector<1x16x16xbf16>
    %1 = vector.shape_cast %0 : vector<1x16x16xbf16> to vector<16x16xbf16>
    %c0_2 = arith.constant 0 : index
    %c0_3 = arith.constant 0 : index
    %c0_4 = arith.constant 0 : index
    %2 = vector.load %arg2[%c0_2, %c0_3, %c0_4] : memref<1x8x16xbf16, #tpu.memory_space<vmem>>, vector<1x8x16xbf16>
    %3 = vector.shape_cast %2 : vector<1x8x16xbf16> to vector<8x16xbf16>
    %cst = arith.constant dense<0.000000e+00> : vector<8x16xf32>
    %4 = tpu.matmul %3, %1, %cst {dimension_numbers = #tpu.dot_dimension_numbers<[1], [0], [0], [1], [0, 0, 1, 1], [], []>} : vector<8x16xbf16>, vector<16x16xbf16>, vector<8x16xf32> -> vector<8x16xf32>
    %c0_5 = arith.constant 0 : index
    %c0_6 = arith.constant 0 : index
    %5 = vector.load %arg3[%c0_5, %c0_6] : memref<32x8xbf16, #tpu.memory_space<vmem>>, vector<32x8xbf16>
    %6 = arith.truncf %4 : vector<8x16xf32> to vector<8x16xbf16>
    %cst_7 = arith.constant dense<0.000000e+00> : vector<32x16xf32>
    %7 = tpu.matmul %5, %6, %cst_7 {dimension_numbers = #tpu.dot_dimension_numbers<[1], [0], [0], [1], [0, 0, 1, 1], [], []>} : vector<32x8xbf16>, vector<8x16xbf16>, vector<32x16xf32> -> vector<32x16xf32>
    %c0_8 = arith.constant 0 : index
    %c0_9 = arith.constant 0 : index
    %8 = vector.load %arg4[%c0_8, %c0_9] : memref<32x1xf32, #tpu.memory_space<vmem>>, vector<32x1xf32>
    %9 = vector.broadcast %8 : vector<32x1xf32> to vector<32x16xf32>
    %10 = arith.addf %7, %9 : vector<32x16xf32>
    %cst_10 = arith.constant 0.000000e+00 : f32
    %11 = vector.broadcast %cst_10 : f32 to vector<32x16xf32>
    %12 = arith.maximumf %10, %11 : vector<32x16xf32>
    %13 = arith.truncf %12 : vector<32x16xf32> to vector<32x16xbf16>
    %cst_11 = arith.constant dense<0.000000e+00> : vector<32x16xf32>
    %14 = tpu.matmul %13, %1, %cst_11 {dimension_numbers = #tpu.dot_dimension_numbers<[1], [0], [0], [1], [0, 0, 1, 1], [], []>} : vector<32x16xbf16>, vector<16x16xbf16>, vector<32x16xf32> -> vector<32x16xf32>
    %c0_12 = arith.constant 0 : index
    %c0_13 = arith.constant 0 : index
    %15 = vector.load %arg5[%c0_12, %c0_13] : memref<32x32xbf16, #tpu.memory_space<vmem>>, vector<32x32xbf16>
    %16 = arith.truncf %14 : vector<32x16xf32> to vector<32x16xbf16>
    %cst_14 = arith.constant dense<0.000000e+00> : vector<32x16xf32>
    %17 = tpu.matmul %15, %16, %cst_14 {dimension_numbers = #tpu.dot_dimension_numbers<[1], [0], [0], [1], [0, 0, 1, 1], [], []>} : vector<32x32xbf16>, vector<32x16xbf16>, vector<32x16xf32> -> vector<32x16xf32>
    %c0_15 = arith.constant 0 : index
    %c0_16 = arith.constant 0 : index
    %18 = vector.load %arg6[%c0_15, %c0_16] : memref<32x1xf32, #tpu.memory_space<vmem>>, vector<32x1xf32>
    %19 = vector.broadcast %18 : vector<32x1xf32> to vector<32x16xf32>
    %20 = arith.addf %17, %19 : vector<32x16xf32>
    %cst_17 = arith.constant 0.000000e+00 : f32
    %21 = vector.broadcast %cst_17 : f32 to vector<32x16xf32>
    %22 = arith.maximumf %20, %21 : vector<32x16xf32>
    %c0_18 = arith.constant 0 : index
    %c0_19 = arith.constant 0 : index
    %23 = vector.load %arg7[%c0_18, %c0_19] : memref<1x32xbf16, #tpu.memory_space<vmem>>, vector<1x32xbf16>
    %24 = arith.truncf %22 : vector<32x16xf32> to vector<32x16xbf16>
    %cst_20 = arith.constant dense<0.000000e+00> : vector<1x16xf32>
    %25 = tpu.matmul %23, %24, %cst_20 {dimension_numbers = #tpu.dot_dimension_numbers<[1], [0], [0], [1], [0, 0, 1, 1], [], []>} : vector<1x32xbf16>, vector<32x16xbf16>, vector<1x16xf32> -> vector<1x16xf32>
    %c0_21 = arith.constant 0 : index
    %c0_22 = arith.constant 0 : index
    %c0_23 = arith.constant 0 : index
    %26 = vector.load %arg8[%c0_21, %c0_22, %c0_23] : memref<1x1x16xf32, #tpu.memory_space<vmem>>, vector<1x1x16xf32>
    %27 = vector.shape_cast %26 : vector<1x1x16xf32> to vector<1x16xf32>
    %28 = vector.shape_cast %25 : vector<1x16xf32> to vector<1x1x16xf32>
    tpu.vector_store %arg8[%c0_21, %c0_22, %c0_23], %28 {strides = array<i32>} : memref<1x1x16xf32, #tpu.memory_space<vmem>>, vector<1x1x16xf32>,
    return
  }
  func.func @transform_0(%arg0: i32) -> (i32, i32, i32) {
    %c0_i32 = arith.constant 0 : i32
    %c0_i32_0 = arith.constant 0 : i32
    %c0_i32_1 = arith.constant 0 : i32
    return %arg0, %c0_i32, %c0_i32_0 : i32, i32, i32
  }
  func.func @transform_1(%arg0: i32) -> (i32, i32, i32) {
    %c0_i32 = arith.constant 0 : i32
    %c0_i32_0 = arith.constant 0 : i32
    %c0_i32_1 = arith.constant 0 : i32
    return %arg0, %c0_i32, %c0_i32_0 : i32, i32, i32
  }
  func.func @transform_2(%arg0: i32) -> (i32, i32) {
    %c0_i32 = arith.constant 0 : i32
    %c0_i32_0 = arith.constant 0 : i32
    %c0_i32_1 = arith.constant 0 : i32
    return %c0_i32, %c0_i32_0 : i32, i32
  }
  func.func @transform_3(%arg0: i32) -> (i32, i32) {
    %c0_i32 = arith.constant 0 : i32
    %c0_i32_0 = arith.constant 0 : i32
    %c0_i32_1 = arith.constant 0 : i32
    return %c0_i32, %c0_i32_0 : i32, i32
  }
  func.func @transform_4(%arg0: i32) -> (i32, i32) {
    %c0_i32 = arith.constant 0 : i32
    %c0_i32_0 = arith.constant 0 : i32
    %c0_i32_1 = arith.constant 0 : i32
    return %c0_i32, %c0_i32_0 : i32, i32
  }
  func.func @transform_5(%arg0: i32) -> (i32, i32) {
    %c0_i32 = arith.constant 0 : i32
    %c0_i32_0 = arith.constant 0 : i32
    %c0_i32_1 = arith.constant 0 : i32
    return %c0_i32, %c0_i32_0 : i32, i32
  }
  func.func @transform_6(%arg0: i32) -> (i32, i32) {
    %c0_i32 = arith.constant 0 : i32
    %c0_i32_0 = arith.constant 0 : i32
    %c0_i32_1 = arith.constant 0 : i32
    return %c0_i32, %c0_i32_0 : i32, i32
  }
  func.func @transform_7(%arg0: i32) -> (i32, i32, i32) {
    %c0_i32 = arith.constant 0 : i32
    %c0_i32_0 = arith.constant 0 : i32
    %c0_i32_1 = arith.constant 0 : i32
    return %arg0, %c0_i32, %c0_i32_0 : i32, i32, i32
  }
}

</mosaic_0001>

<llo_original>
// kernel: pressure_gnn_forward.1
$region0: #{pressure_gnn_forward.1}
  #allocation0 [shape = 'u32[]', space=smem, size = 0x4, offset = 0x4, fixed_abs, tag = 'smem constant byte address 0x4 - core index']
  #allocation1 [shape = 'u32[144,128]{1,0:T(1,128)}', space=vmem, size = 0x12000, scoped, tag = 'internal scratch']
  %s0 = inlined_call_operand.vmem [shape: bf16[8,16,16], index: 0, kind: input, shape index: {}]
  %s1 = inlined_call_operand.vmem [shape: bf16[8,8,16], index: 1, kind: input, shape index: {}]
  %s2 = inlined_call_operand.vmem [shape: bf16[32,8], index: 2, kind: input, shape index: {}]
  %s3 = inlined_call_operand.vmem [shape: f32[32,1], index: 3, kind: input, shape index: {}]
  %s4 = inlined_call_operand.vmem [shape: bf16[32,32], index: 4, kind: input, shape index: {}]
  %s5 = inlined_call_operand.vmem [shape: f32[32,1], index: 5, kind: input, shape index: {}]
  %s6 = inlined_call_operand.vmem [shape: bf16[1,32], index: 6, kind: input, shape index: {}]
  %s7 = inlined_call_operand.vmem [shape: f32[8,1,16], index: 7, kind: output, shape index: {}]
  %s8 = sld [smem:[#allocation0]]
  $region61: #{pressure_gnn_forward.1} parent=0
    _
  %s10 = ssub.s32 1, %s8
  %s11 = scalar_select 0, %s10, %s8
  loop: start=0, step=1, limit=10
  $region2: #{pressure_gnn_forward.1} parent=0 // loop_pre_header
    _
  $region3: #{pressure_gnn_forward.1} parent=0 // loop_header
    %s13 = sphi 0, %s17
    %p14 = scmp.ge.s32.totalorder %s13, 10
    %s23 = sphi 0, %s25
    %s26 = sphi 0, %s23
    %s27 = sphi 0, %s26
    %s43 = sphi 0, %s27
    %s49 = sphi 0, %s51
    %s52 = sphi 0, %s49
    %s53 = sphi 0, %s52
    %s69 = sphi 0, %s53
    %s73 = sphi 0, %s73
    %s75 = sphi 0, %s73
    %s76 = sphi 0, %s75
    %s90 = sphi 0, %s76
    %s94 = sphi 0, %s94
    %s96 = sphi 0, %s94
    %s97 = sphi 0, %s96
    %s111 = sphi 0, %s97
    %s115 = sphi 0, %s115
    %s117 = sphi 0, %s115
    %s118 = sphi 0, %s117
    %s132 = sphi 0, %s118
    %s136 = sphi 0, %s136
    %s138 = sphi 0, %s136
    %s139 = sphi 0, %s138
    %s153 = sphi 0, %s139
    %s157 = sphi 0, %s157
    %s159 = sphi 0, %s157
    %s160 = sphi 0, %s159
    %s174 = sphi 0, %s160
    %s180 = sphi 0, %s182
    %s183 = sphi 0, %s180
    %s184 = sphi 0, %s183
    %s200 = sphi 0, %s184
  $region4: #{pressure_gnn_forward.1} parent=0 // loop_header_branch
    %16 = sbr.rel (%p14) target = $region8
  $region5: #{pressure_gnn_forward.1} parent=0 // loop_body
    %s18 = ssub.s32 %s13, 1
    %s19 = ssub.s32 %s13, 2
    %s20 = sadd.s32 %s13, 1
    %s21 = ssub.s32 %s13, %s20
    %p22 = scmp.eq.s32.totalorder %s21, 0
    %s24 = sadd.s32 %s23, 1
    %s25 = scalar_select %p22, %s23, %s24
    %p28 = pneg %p22
    %p29 = scmp.eq.s32.totalorder %s13, 7
    %p30 = por %p28, %p29
    %p31 = scmp.ne.s32.totalorder %s23, %s26
    %p32 = scmp.eq.s32.totalorder %s13, 0
    %p33 = por %p31, %p32
    %p34 = scmp.ne.s32.totalorder %s23, %s26
    %p35 = scmp.eq.s32.totalorder %s18, 7
    %p36 = por %p34, %p35
    %p37 = scmp.ne.s32.totalorder %s26, %s27
    %p38 = scmp.eq.s32.totalorder %s18, 0
    %p39 = por %p37, %p38
    %p40 = scmp.ne.s32.totalorder %s26, %s27
    %p41 = scmp.eq.s32.totalorder %s19, 7
    %p42 = por %p40, %p41
    %p44 = scmp.ne.s32.totalorder %s27, %s43
    %p45 = scmp.eq.s32.totalorder %s19, 0
    %p46 = por %p44, %p45
    %s47 = ssub.s32 %s13, %s20
    %p48 = scmp.eq.s32.totalorder %s47, 0
    %s50 = sadd.s32 %s49, 1
    %s51 = scalar_select %p48, %s49, %s50
    %p54 = pneg %p48
    %p55 = scmp.eq.s32.totalorder %s13, 7
    %p56 = por %p54, %p55
    %p57 = scmp.ne.s32.totalorder %s49, %s52
    %p58 = scmp.eq.s32.totalorder %s13, 0
    %p59 = por %p57, %p58
    %p60 = scmp.ne.s32.totalorder %s49, %s52
    %p61 = scmp.eq.s32.totalorder %s18, 7
    %p62 = por %p60, %p61
    %p63 = scmp.ne.s32.totalorder %s52, %s53
    %p64 = scmp.eq.s32.totalorder %s18, 0
    %p65 = por %p63, %p64
    %p66 = scmp.ne.s32.totalorder %s52, %s53
    %p67 = scmp.eq.s32.totalorder %s19, 7
    %p68 = por %p66, %p67
    %p70 = scmp.ne.s32.totalorder %s53, %s69
    %p71 = scmp.eq.s32.totalorder %s19, 0
    %p72 = por %p70, %p71
    %s74 = sadd.s32 %s73, 1
    %p77 = scmp.eq.s32.totalorder %s13, 7
    %p78 = scmp.ne.s32.totalorder %s73, %s75
    %p79 = scmp.eq.s32.totalorder %s13, 0
    %p80 = por %p78, %p79
    %p81 = scmp.ne.s32.totalorder %s73, %s75
    %p82 = scmp.eq.s32.totalorder %s18, 7
    %p83 = por %p81, %p82
    %p84 = scmp.ne.s32.totalorder %s75, %s76
    %p85 = scmp.eq.s32.totalorder %s18, 0
    %p86 = por %p84, %p85
    %p87 = scmp.ne.s32.totalorder %s75, %s76
    %p88 = scmp.eq.s32.totalorder %s19, 7
    %p89 = por %p87, %p88
    %p91 = scmp.ne.s32.totalorder %s76, %s90
    %p92 = scmp.eq.s32.totalorder %s19, 0
    %p93 = por %p91, %p92
    %s95 = sadd.s32 %s94, 1
    %p98 = scmp.eq.s32.totalorder %s13, 7
    %p99 = scmp.ne.s32.totalorder %s94, %s96
    %p100 = scmp.eq.s32.totalorder %s13, 0
    %p101 = por %p99, %p100
    %p102 = scmp.ne.s32.totalorder %s94, %s96
    %p103 = scmp.eq.s32.totalorder %s18, 7
    %p104 = por %p102, %p103
    %p105 = scmp.ne.s32.totalorder %s96, %s97
    %p106 = scmp.eq.s32.totalorder %s18, 0
    %p107 = por %p105, %p106
    %p108 = scmp.ne.s32.totalorder %s96, %s97
    %p109 = scmp.eq.s32.totalorder %s19, 7
    %p110 = por %p108, %p109
    %p112 = scmp.ne.s32.totalorder %s97, %s111
    %p113 = scmp.eq.s32.totalorder %s19, 0
    %p114 = por %p112, %p113
    %s116 = sadd.s32 %s115, 1
    %p119 = scmp.eq.s32.totalorder %s13, 7
    %p120 = scmp.ne.s32.totalorder %s115, %s117
    %p121 = scmp.eq.s32.totalorder %s13, 0
    %p122 = por %p120, %p121
    %p123 = scmp.ne.s32.totalorder %s115, %s117
    %p124 = scmp.eq.s32.totalorder %s18, 7
    %p125 = por %p123, %p124
    %p126 = scmp.ne.s32.totalorder %s117, %s118
    %p127 = scmp.eq.s32.totalorder %s18, 0
    %p128 = por %p126, %p127
    %p129 = scmp.ne.s32.totalorder %s117, %s118
    %p130 = scmp.eq.s32.totalorder %s19, 7
    %p131 = por %p129, %p130
    %p133 = scmp.ne.s32.totalorder %s118, %s132
    %p134 = scmp.eq.s32.totalorder %s19, 0
    %p135 = por %p133, %p134
    %s137 = sadd.s32 %s136, 1
    %p140 = scmp.eq.s32.totalorder %s13, 7
    %p141 = scmp.ne.s32.totalorder %s136, %s138
    %p142 = scmp.eq.s32.totalorder %s13, 0
    %p143 = por %p141, %p142
    %p144 = scmp.ne.s32.totalorder %s136, %s138
    %p145 = scmp.eq.s32.totalorder %s18, 7
    %p146 = por %p144, %p145
    %p147 = scmp.ne.s32.totalorder %s138, %s139
    %p148 = scmp.eq.s32.totalorder %s18, 0
    %p149 = por %p147, %p148
    %p150 = scmp.ne.s32.totalorder %s138, %s139
    %p151 = scmp.eq.s32.totalorder %s19, 7
    %p152 = por %p150, %p151
    %p154 = scmp.ne.s32.totalorder %s139, %s153
    %p155 = scmp.eq.s32.totalorder %s19, 0
    %p156 = por %p154, %p155
    %s158 = sadd.s32 %s157, 1
    %p161 = scmp.eq.s32.totalorder %s13, 7
    %p162 = scmp.ne.s32.totalorder %s157, %s159
    %p163 = scmp.eq.s32.totalorder %s13, 0
    %p164 = por %p162, %p163
    %p165 = scmp.ne.s32.totalorder %s157, %s159
    %p166 = scmp.eq.s32.totalorder %s18, 7
    %p167 = por %p165, %p166
    %p168 = scmp.ne.s32.totalorder %s159, %s160
    %p169 = scmp.eq.s32.totalorder %s18, 0
    %p170 = por %p168, %p169
    %p171 = scmp.ne.s32.totalorder %s159, %s160
    %p172 = scmp.eq.s32.totalorder %s19, 7
    %p173 = por %p171, %p172
    %p175 = scmp.ne.s32.totalorder %s160, %s174
    %p176 = scmp.eq.s32.totalorder %s19, 0
    %p177 = por %p175, %p176
    %s178 = ssub.s32 %s13, %s20
    %p179 = scmp.eq.s32.totalorder %s178, 0
    %s181 = sadd.s32 %s180, 1
    %s182 = scalar_select %p179, %s180, %s181
    %p185 = pneg %p179
    %p186 = scmp.eq.s32.totalorder %s13, 7
    %p187 = por %p185, %p186
    %p188 = scmp.ne.s32.totalorder %s180, %s183
    %p189 = scmp.eq.s32.totalorder %s13, 0
    %p190 = por %p188, %p189
    %p191 = scmp.ne.s32.totalorder %s180, %s183
    %p192 = scmp.eq.s32.totalorder %s18, 7
    %p193 = por %p191, %p192
    %p194 = scmp.ne.s32.totalorder %s183, %s184
    %p195 = scmp.eq.s32.totalorder %s18, 0
    %p196 = por %p194, %p195
    %p197 = scmp.ne.s32.totalorder %s183, %s184
    %p198 = scmp.eq.s32.totalorder %s19, 7
    %p199 = por %p197, %p198
    %p201 = scmp.ne.s32.totalorder %s184, %s200
    %p202 = scmp.eq.s32.totalorder %s19, 0
    %p203 = por %p201, %p202
    %p204 = scmp.le.s32.totalorder 1, %s13
    %p205 = scmp.lt.s32.totalorder %s13, 9
    %p206 = pnand %p204, %p205
    %p207 = pneg %p206
    // Predicated region
    $region9: #{pressure_gnn_forward.1} parent=5 // pred_check
      _
    $region10: #{pressure_gnn_forward.1} parent=5 // pred_check_branch
      %209 = sbr.rel (%p206) target = $region12
    $region11: #{pressure_gnn_forward.1} parent=5 // pred_region
      %s210 = ssub.s32 %s13, 1
      // Predicated region
      $region13: #{pressure_gnn_forward.1} parent=11 // pred_check
        %p211 = pneg %p86
      $region14: #{pressure_gnn_forward.1} parent=11 // pred_check_branch
        %213 = sbr.rel (%p211) target = $region16
      $region15: #{pressure_gnn_forward.1} parent=11 // pred_region
        _
      $region16: #{pressure_gnn_forward.1} parent=11 // pred_fallthru
        _
      // Predicated region
      $region17: #{pressure_gnn_forward.1} parent=11 // pred_check
        %p214 = pneg %p107
      $region18: #{pressure_gnn_forward.1} parent=11 // pred_check_branch
        %216 = sbr.rel (%p214) target = $region20
      $region19: #{pressure_gnn_forward.1} parent=11 // pred_region
        _
      $region20: #{pressure_gnn_forward.1} parent=11 // pred_fallthru
        _
      // Predicated region
      $region21: #{pressure_gnn_forward.1} parent=11 // pred_check
        %p217 = pneg %p128
      $region22: #{pressure_gnn_forward.1} parent=11 // pred_check_branch
        %219 = sbr.rel (%p217) target = $region24
      $region23: #{pressure_gnn_forward.1} parent=11 // pred_region
        _
      $region24: #{pressure_gnn_forward.1} parent=11 // pred_fallthru
        _
      // Predicated region
      $region25: #{pressure_gnn_forward.1} parent=11 // pred_check
        %p220 = pneg %p149
      $region26: #{pressure_gnn_forward.1} parent=11 // pred_check_branch
        %222 = sbr.rel (%p220) target = $region28
      $region27: #{pressure_gnn_forward.1} parent=11 // pred_region
        _
      $region28: #{pressure_gnn_forward.1} parent=11 // pred_fallthru
        _
      // Predicated region
      $region29: #{pressure_gnn_forward.1} parent=11 // pred_check
        %p223 = pneg %p170
      $region30: #{pressure_gnn_forward.1} parent=11 // pred_check_branch
        %225 = sbr.rel (%p223) target = $region32
      $region31: #{pressure_gnn_forward.1} parent=11 // pred_region
        _
      $region32: #{pressure_gnn_forward.1} parent=11 // pred_fallthru
        _
    $region12: #{pressure_gnn_forward.1} parent=5 // pred_fallthru
      _
    %p226 = scmp.lt.s32.totalorder %s13, 8
    // Predicated region
    $region33: #{pressure_gnn_forward.1} parent=5 // pred_check
      %p227 = pneg %p226
    $region34: #{pressure_gnn_forward.1} parent=5 // pred_check_branch
      %229 = sbr.rel (%p227) target = $region36
    $region35: #{pressure_gnn_forward.1} parent=5 // pred_region
      // Predicated region
      $region37: #{pressure_gnn_forward.1} parent=35 // pred_check
        %p230 = pneg %p33
      $region38: #{pressure_gnn_forward.1} parent=35 // pred_check_branch
        %232 = sbr.rel (%p230) target = $region40
      $region39: #{pressure_gnn_forward.1} parent=35 // pred_region
        %p233 = scmp.lt.s32.totalorder %s13, 7
        %s234 = scalar_select %p233, %s13, 7
        %s235 = smul.addr %s234, 2
        %s236 = smul.addr %s235, 4
        %s237 = scalar_lea.vmem %s0, %s236
      $region40: #{pressure_gnn_forward.1} parent=35 // pred_fallthru
        _
      // Predicated region
      $region41: #{pressure_gnn_forward.1} parent=35 // pred_check
        %p238 = pneg %p59
      $region42: #{pressure_gnn_forward.1} parent=35 // pred_check_branch
        %240 = sbr.rel (%p238) target = $region44
      $region43: #{pressure_gnn_forward.1} parent=35 // pred_region
        %p241 = scmp.lt.s32.totalorder %s13, 7
        %s242 = scalar_select %p241, %s13, 7
        %s243 = smul.addr %s242, 4
        %s244 = scalar_lea.vmem %s1, %s243
      $region44: #{pressure_gnn_forward.1} parent=35 // pred_fallthru
        _
    $region36: #{pressure_gnn_forward.1} parent=5 // pred_fallthru
      _
    %p245 = scmp.le.s32.totalorder 1, %s13
    %p246 = scmp.lt.s32.totalorder %s13, 9
    %p247 = pnand %p245, %p246
    %p248 = pneg %p247
    // Predicated region
    $region45: #{pressure_gnn_forward.1} parent=5 // pred_check
      _
    $region46: #{pressure_gnn_forward.1} parent=5 // pred_check_branch
      %250 = sbr.rel (%p247) target = $region48
    $region47: #{pressure_gnn_forward.1} parent=5 // pred_region
      %s251 = ssub.s32 %s13, 1
      %p252 = scmp.lt.s32.totalorder %s18, 7
      %s253 = scalar_select %p252, %s18, 7
      %s254 = smul.addr %s253, 2
      %s255 = smul.addr %s254, 4
      %s256 = scalar_lea.vmem %s0, %s255
      %p257 = pneg %p39
      %p258 = pneg %p36
      %p259 = scmp.lt.s32.totalorder %s18, 7
      %s260 = scalar_select %p259, %s18, 7
      %s261 = smul.addr %s260, 4
      %s262 = scalar_lea.vmem %s1, %s261
      %p263 = pneg %p65
      %p264 = pneg %p62
      %p265 = pneg %p86
      %p266 = pneg %p83
      %p267 = pneg %p107
      %p268 = pneg %p104
      %p269 = pneg %p128
      %p270 = pneg %p125
      %p271 = pneg %p149
      %p272 = pneg %p146
      %p273 = pneg %p170
      %p274 = pneg %p167
      %p275 = pneg %p196
      %p276 = pneg %p193
      %p277 = scmp.lt.s32.totalorder %s18, 7
      %s278 = scalar_select %p277, %s18, 7
      %s279 = scalar_lea.vmem %s7, %s278
      %p280 = scmp.lt.s32.totalorder %s18, 7
      %s281 = scalar_select %p280, %s18, 7
      %s282 = smul.addr %s281, 2
      %s283 = smul.addr %s282, 4
      %s284 = scalar_lea.vmem %s0, %s283
      %p285 = scmp.lt.s32.totalorder %s18, 7
      %s286 = scalar_select %p285, %s18, 7
      %s287 = smul.addr %s286, 4
      %s288 = scalar_lea.vmem %s1, %s287
      %p289 = scmp.lt.s32.totalorder %s18, 7
      %s290 = scalar_select %p289, %s18, 7
      %s291 = scalar_lea.vmem %s7, %s290
      %v293 = vld [vmem:[%s284] sm:$0xf]
      %v294 = vld [vmem:[%s284 + $0x4] sm:$0xf]
      %v295 = vld [vmem:[%s288] sm:$0xf]
      %v298 = vunpack.c.l.b16 %v293
      %v299 = vunpack.c.l.b16 %v294
      %v300 = vpack.c.b16 %v299, %v298
      %vm302 = vcmask 130048
      %v304 = vsel %vm302, %v295, 0
      %306 = vmatprep.subr.bf16.mxu0 0
      %307 = vmatpush1.bf16.msra.mxu0 0
      %308 = vmatprep.subr.bf16.mxu0 0
      %309 = vmatpush1.bf16.msra.mxu0 0
      %310 = vmatprep.subr.bf16.mxu0 0
      %311 = vmatpush1.bf16.msra.mxu0 0
      %312 = vmatprep.subr.bf16.mxu0 0
      %313 = vmatpush1.bf16.msra.mxu0 0
      %314 = vmatprep.subr.bf16.mxu0 0
      %315 = vmatpush1.bf16.msra.mxu0 0
      %316 = vmatprep.subr.bf16.mxu0 0
      %317 = vmatpush1.bf16.msra.mxu0 0
      %318 = vmatprep.subr.bf16.mxu0 0
      %319 = vmatpush1.bf16.msra.mxu0 0
      %320 = vmatprep.subr.bf16.mxu0 0
      %321 = vmatpush1.bf16.msra.mxu0 %v300
      %322 = vmatprep.subr.bf16.mxu0 0
      %323 = vmatpush2.bf16.msra.mxu0 0
      %324 = vmatprep.subr.bf16.mxu0 0
      %325 = vmatpush2.bf16.msra.mxu0 0
      %326 = vmatprep.subr.bf16.mxu0 0
      %327 = vmatpush2.bf16.msra.mxu0 0
      %328 = vmatprep.subr.bf16.mxu0 0
      %329 = vmatpush2.bf16.msra.mxu0 0
      %330 = vmatprep.subr.bf16.mxu0 0
      %331 = vmatpush2.bf16.msra.mxu0 0
      %332 = vmatprep.subr.bf16.mxu0 0
      %333 = vmatpush2.bf16.msra.mxu0 0
      %334 = vmatprep.subr.bf16.mxu0 0
      %335 = vmatpush2.bf16.msra.mxu0 0
      %336 = vmatprep.subr.bf16.mxu0 0
      %337 = vmatpush2.bf16.msra.mxu0 0
      %338 = vmatprep.mubr.bf16.mxu0 0
      %339 = vmatmul.mubr.bf16.gmra.mxu0 %v304
      %v340 = vpop.f32.mrf.mxu0
      %v341 = vadd.f32 0.0, %v340
      %v342 = vpop.f32.mrf.mxu0
      %v343 = vpop.f32.mrf.mxu0
      %v344 = vpop.f32.mrf.mxu0
      %345 = vdwg.mxu0
      %v346 = vld [vmem:[%s2] sm:$0xf]
      %v347 = vld [vmem:[%s2 + $0x4] sm:$0xf]
      %v348 = vld [vmem:[%s2 + $0x8] sm:$0xf]
      %v349 = vld [vmem:[%s2 + $0xc] sm:$0xf]
      %v350 = vpack.c.bf16 %v341, %v341
      %v351 = vld [vmem:[%s3] sm:$0xff]
      %v352 = vld [vmem:[%s3 + $0x8] sm:$0xff]
      %v353 = vld [vmem:[%s3 + $0x10] sm:$0xff]
      %v354 = vld [vmem:[%s3 + $0x18] sm:$0xff]
      %356 = vset.pattern.permute.xlu0 0
      %357 = vperm.xlu0 %356, %v351
      %v358 = vpop.permute.xlu0 %357
      %361 = vset.pattern.permute.xlu0 0
      %362 = vperm.xlu0 %361, %v352
      %v363 = vpop.permute.xlu0 %362
      %366 = vset.pattern.permute.xlu0 0
      %367 = vperm.xlu0 %366, %v353
      %v368 = vpop.permute.xlu0 %367
      %371 = vset.pattern.permute.xlu0 0
      %372 = vperm.xlu0 %371, %v354
      %v373 = vpop.permute.xlu0 %372
      %v379 = vunpack.c.l.b16 %v346
      %v380 = vunpack.c.l.b16 %v347
      %v381 = vunpack.c.l.b16 %v348
      %v382 = vunpack.c.l.b16 %v349
      %v383 = vpack.c.b16 %v380, %v379
      %v384 = vpack.c.b16 %v382, %v381
      %vm385 = vcmask 64512
      %v387 = vsel %vm385, %v383, 0
      %v390 = vsel %vm385, %v384, 0
      %vm392 = vcmask 1043456
      %v394 = vsel %vm392, %v350, 0
      %396 = vmatprep.subr.bf16.mxu0 0
      %397 = vmatpush1.bf16.msra.mxu0 0
      %398 = vmatprep.subr.bf16.mxu0 0
      %399 = vmatpush1.bf16.msra.mxu0 0
      %400 = vmatprep.subr.bf16.mxu0 0
      %401 = vmatpush1.bf16.msra.mxu0 0
      %402 = vmatprep.subr.bf16.mxu0 0
      %403 = vmatpush1.bf16.msra.mxu0 0
      %404 = vmatprep.subr.bf16.mxu0 0
      %405 = vmatpush1.bf16.msra.mxu0 0
      %406 = vmatprep.subr.bf16.mxu0 0
      %407 = vmatpush1.bf16.msra.mxu0 0
      %408 = vmatprep.subr.bf16.mxu0 0
      %409 = vmatpush1.bf16.msra.mxu0 0
      %410 = vmatprep.subr.bf16.mxu0 0
      %411 = vmatpush1.bf16.msra.mxu0 %v394
      %412 = vmatprep.subr.bf16.mxu0 0
      %413 = vmatpush2.bf16.msra.mxu0 0
      %414 = vmatprep.subr.bf16.mxu0 0
      %415 = vmatpush2.bf16.msra.mxu0 0
      %416 = vmatprep.subr.bf16.mxu0 0
      %417 = vmatpush2.bf16.msra.mxu0 0
      %418 = vmatprep.subr.bf16.mxu0 0
      %419 = vmatpush2.bf16.msra.mxu0 0
      %420 = vmatprep.subr.bf16.mxu0 0
      %421 = vmatpush2.bf16.msra.mxu0 0
      %422 = vmatprep.subr.bf16.mxu0 0
      %423 = vmatpush2.bf16.msra.mxu0 0
      %424 = vmatprep.subr.bf16.mxu0 0
      %425 = vmatpush2.bf16.msra.mxu0 0
      %426 = vmatprep.subr.bf16.mxu0 0
      %427 = vmatpush2.bf16.msra.mxu0 0
      %428 = vmatprep.mubr.bf16.mxu0 0
      %429 = vmatmul.mubr.bf16.gmra.mxu0 %v387
      %v430 = vpop.f32.mrf.mxu0
      %v431 = vadd.f32 %v358, %v430
      %v432 = vpop.f32.mrf.mxu0
      %v433 = vpop.f32.mrf.mxu0
      %v434 = vadd.f32 %v363, %v433
      %v435 = vpop.f32.mrf.mxu0
      %436 = vmatprep.mubr.bf16.mxu0 0
      %437 = vmatmul.mubr.bf16.gmra.mxu0 %v390
      %v438 = vpop.f32.mrf.mxu0
      %v439 = vadd.f32 %v368, %v438
      %v440 = vpop.f32.mrf.mxu0
      %v441 = vpop.f32.mrf.mxu0
      %v442 = vadd.f32 %v373, %v441
      %v443 = vpop.f32.mrf.mxu0
      %444 = vdwg.mxu0
      %v445 = vmax.f32 %v431, 0.0
      %v446 = vmax.f32 %v434, 0.0
      %v447 = vmax.f32 %v439, 0.0
      %v448 = vmax.f32 %v442, 0.0
      %v449 = vpack.c.bf16 %v446, %v445
      %v450 = vpack.c.bf16 %v448, %v447
      %v452 = vsel %vm302, %v449, 0
      %v455 = vsel %vm302, %v450, 0
      %457 = vmatprep.subr.bf16.mxu0 0
      %458 = vmatpush1.bf16.msra.mxu0 0
      %459 = vmatprep.subr.bf16.mxu0 0
      %460 = vmatpush1.bf16.msra.mxu0 0
      %461 = vmatprep.subr.bf16.mxu0 0
      %462 = vmatpush1.bf16.msra.mxu0 0
      %463 = vmatprep.subr.bf16.mxu0 0
      %464 = vmatpush1.bf16.msra.mxu0 0
      %465 = vmatprep.subr.bf16.mxu0 0
      %466 = vmatpush1.bf16.msra.mxu0 0
      %467 = vmatprep.subr.bf16.mxu0 0
      %468 = vmatpush1.bf16.msra.mxu0 0
      %469 = vmatprep.subr.bf16.mxu0 0
      %470 = vmatpush1.bf16.msra.mxu0 0
      %471 = vmatprep.subr.bf16.mxu0 0
      %472 = vmatpush1.bf16.msra.mxu0 %v300
      %473 = vmatprep.subr.bf16.mxu0 0
      %474 = vmatpush2.bf16.msra.mxu0 0
      %475 = vmatprep.subr.bf16.mxu0 0
      %476 = vmatpush2.bf16.msra.mxu0 0
      %477 = vmatprep.subr.bf16.mxu0 0
      %478 = vmatpush2.bf16.msra.mxu0 0
      %479 = vmatprep.subr.bf16.mxu0 0
      %480 = vmatpush2.bf16.msra.mxu0 0
      %481 = vmatprep.subr.bf16.mxu0 0
      %482 = vmatpush2.bf16.msra.mxu0 0
      %483 = vmatprep.subr.bf16.mxu0 0
      %484 = vmatpush2.bf16.msra.mxu0 0
      %485 = vmatprep.subr.bf16.mxu0 0
      %486 = vmatpush2.bf16.msra.mxu0 0
      %487 = vmatprep.subr.bf16.mxu0 0
      %488 = vmatpush2.bf16.msra.mxu0 0
      %489 = vmatprep.mubr.bf16.mxu0 0
      %490 = vmatmul.mubr.bf16.gmra.mxu0 %v452
      %v491 = vpop.f32.mrf.mxu0
      %v492 = vadd.f32 0.0, %v491
      %v493 = vpop.f32.mrf.mxu0
      %v494 = vpop.f32.mrf.mxu0
      %v495 = vadd.f32 0.0, %v494
      %v496 = vpop.f32.mrf.mxu0
      %497 = vmatprep.mubr.bf16.mxu0 0
      %498 = vmatmul.mubr.bf16.gmra.mxu0 %v455
      %v499 = vpop.f32.mrf.mxu0
      %v500 = vadd.f32 0.0, %v499
      %v501 = vpop.f32.mrf.mxu0
      %v502 = vpop.f32.mrf.mxu0
      %v503 = vadd.f32 0.0, %v502
      %v504 = vpop.f32.mrf.mxu0
      %505 = vdwg.mxu0
      %v506 = vld [vmem:[%s4] sm:$0xf]
      %v507 = vld [vmem:[%s4 + $0x4] sm:$0xf]
      %v508 = vld [vmem:[%s4 + $0x8] sm:$0xf]
      %v509 = vld [vmem:[%s4 + $0xc] sm:$0xf]
      %v510 = vpack.c.bf16 %v495, %v492
      %v511 = vpack.c.bf16 %v503, %v500
      %v512 = vld [vmem:[%s5] sm:$0xff]
      %v513 = vld [vmem:[%s5 + $0x8] sm:$0xff]
      %v514 = vld [vmem:[%s5 + $0x10] sm:$0xff]
      %v515 = vld [vmem:[%s5 + $0x18] sm:$0xff]
      %517 = vset.pattern.permute.xlu0 0
      %518 = vperm.xlu0 %517, %v512
      %v519 = vpop.permute.xlu0 %518
      %522 = vset.pattern.permute.xlu0 0
      %523 = vperm.xlu0 %522, %v513
      %v524 = vpop.permute.xlu0 %523
      %527 = vset.pattern.permute.xlu0 0
      %528 = vperm.xlu0 %527, %v514
      %v529 = vpop.permute.xlu0 %528
      %532 = vset.pattern.permute.xlu0 0
      %533 = vperm.xlu0 %532, %v515
      %v534 = vpop.permute.xlu0 %533
      %v540 = vunpack.c.l.b16 %v506
      %v541 = vunpack.c.l.b16 %v507
      %v542 = vunpack.c.l.b16 %v508
      %v543 = vunpack.c.l.b16 %v509
      %v544 = vpack.c.b16 %v541, %v540
      %v545 = vpack.c.b16 %v543, %v542
      %vm546 = vcmask 261120
      %v548 = vsel %vm546, %v544, 0
      %v551 = vsel %vm546, %v545, 0
      %553 = vmatprep.subr.bf16.mxu0 0
      %554 = vmatpush1.bf16.msra.mxu0 0
      %555 = vmatprep.subr.bf16.mxu0 0
      %556 = vmatpush1.bf16.msra.mxu0 0
      %557 = vmatprep.subr.bf16.mxu0 0
      %558 = vmatpush1.bf16.msra.mxu0 0
      %559 = vmatprep.subr.bf16.mxu0 0
      %560 = vmatpush1.bf16.msra.mxu0 0
      %561 = vmatprep.subr.bf16.mxu0 0
      %562 = vmatpush1.bf16.msra.mxu0 0
      %563 = vmatprep.subr.bf16.mxu0 0
      %564 = vmatpush1.bf16.msra.mxu0 0
      %565 = vmatprep.subr.bf16.mxu0 0
      %566 = vmatpush1.bf16.msra.mxu0 %v511
      %567 = vmatprep.subr.bf16.mxu0 0
      %568 = vmatpush1.bf16.msra.mxu0 %v510
      %569 = vmatprep.subr.bf16.mxu0 0
      %570 = vmatpush2.bf16.msra.mxu0 0
      %571 = vmatprep.subr.bf16.mxu0 0
      %572 = vmatpush2.bf16.msra.mxu0 0
      %573 = vmatprep.subr.bf16.mxu0 0
      %574 = vmatpush2.bf16.msra.mxu0 0
      %575 = vmatprep.subr.bf16.mxu0 0
      %576 = vmatpush2.bf16.msra.mxu0 0
      %577 = vmatprep.subr.bf16.mxu0 0
      %578 = vmatpush2.bf16.msra.mxu0 0
      %579 = vmatprep.subr.bf16.mxu0 0
      %580 = vmatpush2.bf16.msra.mxu0 0
      %581 = vmatprep.subr.bf16.mxu0 0
      %582 = vmatpush2.bf16.msra.mxu0 0
      %583 = vmatprep.subr.bf16.mxu0 0
      %584 = vmatpush2.bf16.msra.mxu0 0
      %585 = vmatprep.mubr.bf16.mxu0 0
      %586 = vmatmul.mubr.bf16.gmra.mxu0 %v548
      %v587 = vpop.f32.mrf.mxu0
      %v588 = vadd.f32 %v519, %v587
      %v589 = vpop.f32.mrf.mxu0
      %v590 = vpop.f32.mrf.mxu0
      %v591 = vadd.f32 %v524, %v590
      %v592 = vpop.f32.mrf.mxu0
      %593 = vmatprep.mubr.bf16.mxu0 0
      %594 = vmatmul.mubr.bf16.gmra.mxu0 %v551
      %v595 = vpop.f32.mrf.mxu0
      %v596 = vadd.f32 %v529, %v595
      %v597 = vpop.f32.mrf.mxu0
      %v598 = vpop.f32.mrf.mxu0
      %v599 = vadd.f32 %v534, %v598
      %v600 = vpop.f32.mrf.mxu0
      %601 = vdwg.mxu0
      %v602 = vmax.f32 %v588, 0.0
      %v603 = vmax.f32 %v591, 0.0
      %v604 = vmax.f32 %v596, 0.0
      %v605 = vmax.f32 %v599, 0.0
      %v606 = vld [vmem:[%s6] sm:$0x1]
      %v607 = vpack.c.bf16 %v603, %v602
      %v608 = vpack.c.bf16 %v605, %v604
      %v610 = vsel %vm546, %v606, 0
      %612 = vmatprep.subr.bf16.mxu0 0
      %613 = vmatpush1.bf16.msra.mxu0 0
      %614 = vmatprep.subr.bf16.mxu0 0
      %615 = vmatpush1.bf16.msra.mxu0 0
      %616 = vmatprep.subr.bf16.mxu0 0
      %617 = vmatpush1.bf16.msra.mxu0 0
      %618 = vmatprep.subr.bf16.mxu0 0
      %619 = vmatpush1.bf16.msra.mxu0 0
      %620 = vmatprep.subr.bf16.mxu0 0
      %621 = vmatpush1.bf16.msra.mxu0 0
      %622 = vmatprep.subr.bf16.mxu0 0
      %623 = vmatpush1.bf16.msra.mxu0 0
      %624 = vmatprep.subr.bf16.mxu0 0
      %625 = vmatpush1.bf16.msra.mxu0 %v608
      %626 = vmatprep.subr.bf16.mxu0 0
      %627 = vmatpush1.bf16.msra.mxu0 %v607
      %628 = vmatprep.subr.bf16.mxu0 0
      %629 = vmatpush2.bf16.msra.mxu0 0
      %630 = vmatprep.subr.bf16.mxu0 0
      %631 = vmatpush2.bf16.msra.mxu0 0
      %632 = vmatprep.subr.bf16.mxu0 0
      %633 = vmatpush2.bf16.msra.mxu0 0
      %634 = vmatprep.subr.bf16.mxu0 0
      %635 = vmatpush2.bf16.msra.mxu0 0
      %636 = vmatprep.subr.bf16.mxu0 0
      %637 = vmatpush2.bf16.msra.mxu0 0
      %638 = vmatprep.subr.bf16.mxu0 0
      %639 = vmatpush2.bf16.msra.mxu0 0
      %640 = vmatprep.subr.bf16.mxu0 0
      %641 = vmatpush2.bf16.msra.mxu0 0
      %642 = vmatprep.subr.bf16.mxu0 0
      %643 = vmatpush2.bf16.msra.mxu0 0
      %644 = vmatprep.mubr.bf16.mxu0 0
      %645 = vmatmul.mubr.bf16.gmra.mxu0 %v610
      %v646 = vpop.f32.mrf.mxu0
      %v647 = vadd.f32 0.0, %v646
      %v648 = vpop.f32.mrf.mxu0
      %v649 = vpop.f32.mrf.mxu0
      %v650 = vpop.f32.mrf.mxu0
      %651 = vdwg.mxu0
      %vm652 = vcmask 122880
      %653 = vst.msk [vmem:[%s291] sm:$0x1] %vm652, %v647
      %p654 = scmp.lt.s32.totalorder %s18, 7
      %s655 = scalar_select %p654, %s18, 7
      %s656 = scalar_lea.vmem %s7, %s655
      // Predicated region
      $region49: #{pressure_gnn_forward.1} parent=47 // pred_check
        %p657 = pneg %p193
      $region50: #{pressure_gnn_forward.1} parent=47 // pred_check_branch
        %659 = sbr.rel (%p657) target = $region52
      $region51: #{pressure_gnn_forward.1} parent=47 // pred_region
        _
      $region52: #{pressure_gnn_forward.1} parent=47 // pred_fallthru
        _
    $region48: #{pressure_gnn_forward.1} parent=5 // pred_fallthru
      _
    %p660 = scmp.le.s32.totalorder 2, %s13
    // Predicated region
    $region53: #{pressure_gnn_forward.1} parent=5 // pred_check
      %p661 = pneg %p660
    $region54: #{pressure_gnn_forward.1} parent=5 // pred_check_branch
      %663 = sbr.rel (%p661) target = $region56
    $region55: #{pressure_gnn_forward.1} parent=5 // pred_region
      %s664 = ssub.s32 %s13, 2
      // Predicated region
      $region57: #{pressure_gnn_forward.1} parent=55 // pred_check
        %p665 = pneg %p199
      $region58: #{pressure_gnn_forward.1} parent=55 // pred_check_branch
        %667 = sbr.rel (%p665) target = $region60
      $region59: #{pressure_gnn_forward.1} parent=55 // pred_region
        %p668 = scmp.lt.s32.totalorder %s19, 7
        %s669 = scalar_select %p668, %s19, 7
        %s670 = scalar_lea.vmem %s7, %s669
      $region60: #{pressure_gnn_forward.1} parent=55 // pred_fallthru
        _
    $region56: #{pressure_gnn_forward.1} parent=5 // pred_fallthru
      _
  $region6: #{pressure_gnn_forward.1} parent=0 // loop_footer
    %s17 = sadd.s32 1, %s13
  $region7: #{pressure_gnn_forward.1} parent=0 // loop_footer_branch
    %12 = sbr.rel target = $region3
  $region8: #{pressure_gnn_forward.1} parent=0 // loop_exit
    _

</llo_original>
